<compile_context>
chip_gen: v7x
topology: tpu7x:2x2x1
jax: 0.10.0
libtpu: 0.0.40
codegen_flags: <defaults>
</compile_context>

<pallas_src>
import math
import jax
import jax.numpy as jnp
from jax.experimental import pallas as pl
from jax.experimental.pallas import tpu as pltpu

VOCAB = 16      # input_size
HIDDEN = 32     # hidden_size
N_LAYERS = 1    # n_layers (module default)
BATCH = 8       # independent sequences per call (sublane-aligned)
SEQ = 8         # tokens per sequence processed inside one pallas_call


def _encoder_seq_kernel(tok_ref,        # SMEM (SEQ, BATCH) int32  (scalar prefetch)
                        emb_ref,        # VMEM (VOCAB, H)          resident
                        w_ref,          # VMEM (2H, 4H)            resident (fused)
                        b_ref,          # VMEM (1, 4H)             resident (fused)
                        h0_ref,         # VMEM (B, H)              resident
                        out_ref,        # VMEM (1, B, H) block for timestep t
                        hfin_ref,       # VMEM (B, H)              resident output
                        h_scratch):     # VMEM (B, H) carried hidden state
    H = HIDDEN
    t = pl.program_id(0)

    @pl.when(t == 0)
    def _():
        h_scratch[...] = h0_ref[...]

    # Embedding lookup for this timestep's BATCH tokens (row gather from VMEM).
    rows = [emb_ref[pl.ds(tok_ref[t, b], 1), :] for b in range(BATCH)]
    x = jnp.concatenate(rows, axis=0)                      # (B, H)

    h = h_scratch[...]                                     # (B, H)
    w = w_ref[...]                                         # (2H, 4H)
    bias = b_ref[...]                                      # (1, 4H)

    # n_layers is a compile-time constant -> static unroll (the module reuses
    # the same single-layer GRU for every "layer").
    for _ in range(N_LAYERS):
        xh = jnp.concatenate([x, h], axis=1)               # (B, 2H) = (8, 64)
        g = jnp.dot(xh, w, preferred_element_type=jnp.float32) + bias   # (B, 4H)=128 lanes
        r = jax.nn.sigmoid(g[:, 0:H])                      # i_r + h_r + b_ir + b_hr
        z = jax.nn.sigmoid(g[:, H:2 * H])                  # i_z + h_z + b_iz + b_hz
        n = jnp.tanh(g[:, 2 * H:3 * H] + r * g[:, 3 * H:4 * H])
        h = (1.0 - z) * n + z * h
        x = h                                              # output feeds next layer

    h_scratch[...] = h
    out_ref[0, :, :] = h                                   # per-step output

    @pl.when(t == pl.num_programs(0) - 1)
    def _():
        hfin_ref[...] = h                                  # final hidden


def fuse_gru_params(params):
    """One-time glue (NOT on the per-call path): build the fused GRU weight
    W_fused (2H, 4H) = [[Wih_rz^T, Wih_n^T, 0], [Whh_rz^T, 0, Whh_n^T]] and the
    fused bias [b_ih_rz + b_hh_rz, b_in, b_hn]."""
    H = HIDDEN
    w_ih_t = params["w_ih"].T.astype(jnp.float32)          # (H, 3H), cols r|z|n
    w_hh_t = params["w_hh"].T.astype(jnp.float32)          # (H, 3H)
    zeros = jnp.zeros((H, H), jnp.float32)
    top = jnp.concatenate([w_ih_t[:, :2 * H], w_ih_t[:, 2 * H:], zeros], axis=1)
    bot = jnp.concatenate([w_hh_t[:, :2 * H], zeros, w_hh_t[:, 2 * H:]], axis=1)
    w_fused = jnp.concatenate([top, bot], axis=0)          # (2H, 4H) = (64, 128)
    b_ih = params["b_ih"].astype(jnp.float32)
    b_hh = params["b_hh"].astype(jnp.float32)
    b_fused = jnp.concatenate(
        [b_ih[:2 * H] + b_hh[:2 * H], b_ih[2 * H:], b_hh[2 * H:]]).reshape(1, 4 * H)
    return {"embedding": params["embedding"].astype(jnp.float32),
            "w_fused": w_fused, "b_fused": b_fused}


@jax.jit
def encoder_rnn_forward_seq(tokens, hidden, fused):
    """tokens: (BATCH, SEQ) int32; hidden: (1, BATCH, HIDDEN) f32.
    Returns (outputs (SEQ, BATCH, HIDDEN), hidden (1, BATCH, HIDDEN))."""
    emb, w_fused, b_fused = fused["embedding"], fused["w_fused"], fused["b_fused"]
    # bounds-safe token ids, laid out (SEQ, BATCH) for SMEM scalar prefetch
    tok = jnp.clip(tokens.astype(jnp.int32), 0, VOCAB - 1).T
    h0 = jnp.reshape(hidden, (BATCH, HIDDEN)).astype(jnp.float32)

    grid_spec = pltpu.PrefetchScalarGridSpec(
        num_scalar_prefetch=1,
        grid=(SEQ,),
        in_specs=[
            pl.BlockSpec((VOCAB, HIDDEN), lambda t, tok: (0, 0)),
            pl.BlockSpec((2 * HIDDEN, 4 * HIDDEN), lambda t, tok: (0, 0)),
            pl.BlockSpec((1, 4 * HIDDEN), lambda t, tok: (0, 0)),
            pl.BlockSpec((BATCH, HIDDEN), lambda t, tok: (0, 0)),
        ],
        out_specs=(
            pl.BlockSpec((1, BATCH, HIDDEN), lambda t, tok: (t, 0, 0)),
            pl.BlockSpec((BATCH, HIDDEN), lambda t, tok: (0, 0)),
        ),
        scratch_shapes=[pltpu.VMEM((BATCH, HIDDEN), jnp.float32)],
    )

    outs, hfin = pl.pallas_call(
        _encoder_seq_kernel,
        out_shape=(jax.ShapeDtypeStruct((SEQ, BATCH, HIDDEN), jnp.float32),
                   jax.ShapeDtypeStruct((BATCH, HIDDEN), jnp.float32)),
        grid_spec=grid_spec,
        compiler_params=pltpu.CompilerParams(
            dimension_semantics=("arbitrary",)),   # time is a true recurrence
    )(tok, emb, w_fused, b_fused, h0)

    return outs, hfin.reshape(1, BATCH, HIDDEN)


def init_params(key):
    """PyTorch-layout parameters: embedding (VOCAB,H) ~ N(0,1); GRU weights /
    biases U(-1/sqrt(H), 1/sqrt(H)) with gate order r,z,n."""
    k_emb, k_wih, k_whh, k_bih, k_bhh = jax.random.split(key, 5)
    bound = 1.0 / math.sqrt(HIDDEN)
    return {
        "embedding": jax.random.normal(k_emb, (VOCAB, HIDDEN), jnp.float32),
        "w_ih": jax.random.uniform(k_wih, (3 * HIDDEN, HIDDEN), jnp.float32, -bound, bound),
        "w_hh": jax.random.uniform(k_whh, (3 * HIDDEN, HIDDEN), jnp.float32, -bound, bound),
        "b_ih": jax.random.uniform(k_bih, (3 * HIDDEN,), jnp.float32, -bound, bound),
        "b_hh": jax.random.uniform(k_bhh, (3 * HIDDEN,), jnp.float32, -bound, bound),
    }


def _reference_forward(tokens, hidden, params):
    """Pure-JAX reference: repeated EncoderRNN.forward over the sequence."""
    H = HIDDEN
    hp = jax.lax.Precision.HIGHEST
    emb, w_ih, w_hh = params["embedding"], params["w_ih"], params["w_hh"]
    b_ih, b_hh = params["b_ih"], params["b_hh"]
    h = jnp.reshape(hidden, (BATCH, H))
    outs = []
    for t in range(SEQ):
        x = emb[tokens[:, t]]
        for _ in range(N_LAYERS):
            gi = jnp.dot(x, w_ih.T, precision=hp) + b_ih
            gh = jnp.dot(h, w_hh.T, precision=hp) + b_hh
            r = jax.nn.sigmoid(gi[:, :H] + gh[:, :H])
            z = jax.nn.sigmoid(gi[:, H:2 * H] + gh[:, H:2 * H])
            n = jnp.tanh(gi[:, 2 * H:] + r * gh[:, 2 * H:])
            h = (1.0 - z) * n + z * h
            x = h
        outs.append(h)
    return jnp.stack(outs, axis=0), h.reshape(1, BATCH, H)


if __name__ == "__main__":
    key = jax.random.PRNGKey(0)
    params = init_params(key)
    fused = fuse_gru_params(params)          # one-time weight fusion / transpose

    tokens = jax.random.randint(jax.random.fold_in(key, 1),
                                (BATCH, SEQ), 0, VOCAB, dtype=jnp.int32)
    hidden = jnp.zeros((1, BATCH, HIDDEN), jnp.float32)   # initHidden() per sequence

    outs, hfin = encoder_rnn_forward_seq(tokens, hidden, fused)
    jax.block_until_ready((outs, hfin))

    assert outs.shape == (SEQ, BATCH, HIDDEN) and hfin.shape == (1, BATCH, HIDDEN)
    assert bool(jnp.all(jnp.isfinite(outs))) and bool(jnp.all(jnp.isfinite(hfin)))

    ref_outs, ref_hfin = _reference_forward(tokens, hidden, params)
    assert bool(jnp.allclose(outs, ref_outs, rtol=5e-3, atol=5e-3))
    assert bool(jnp.allclose(hfin, ref_hfin, rtol=5e-3, atol=5e-3))
    print("KERNEL_OK")
</pallas_src>

<mosaic_0001>
module attributes {stable_mosaic.version = 11 : i64} {
  func.func @_encoder_seq_kernel(%arg0: i32, %arg1: memref<8x8xi32, #tpu.memory_space<smem>>, %arg2: memref<16x32xf32, #tpu.memory_space<vmem>>, %arg3: memref<64x128xf32, #tpu.memory_space<vmem>>, %arg4: memref<1x128xf32, #tpu.memory_space<vmem>>, %arg5: memref<8x32xf32, #tpu.memory_space<vmem>>, %arg6: memref<1x8x32xf32, #tpu.memory_space<vmem>>, %arg7: memref<8x32xf32, #tpu.memory_space<vmem>>, %arg8: memref<8x32xf32, #tpu.memory_space<vmem>>) attributes {dimension_semantics = [#tpu.dimension_semantics<arbitrary>], iteration_bounds = array<i64: 8>, scalar_prefetch = 1 : i64, scratch_operands = 1 : i64, tpu.core_type = #tpu.core_type<tc>, window_params = [{pipeline_mode = #tpu.pipeline_mode<synchronous>, transform_indices = @transform_0, window_bounds = array<i64: 16, 32>}, {pipeline_mode = #tpu.pipeline_mode<synchronous>, transform_indices = @transform_1, window_bounds = array<i64: 64, 128>}, {pipeline_mode = #tpu.pipeline_mode<synchronous>, transform_indices = @transform_2, window_bounds = array<i64: 1, 128>}, {pipeline_mode = #tpu.pipeline_mode<synchronous>, transform_indices = @transform_3, window_bounds = array<i64: 8, 32>}, {transform_indices = @transform_4, window_bounds = array<i64: 1, 8, 32>}, {pipeline_mode = #tpu.pipeline_mode<synchronous>, transform_indices = @transform_5, window_bounds = array<i64: 8, 32>}]} {
    %c0_i32 = arith.constant 0 : i32
    %0 = arith.cmpi eq, %arg0, %c0_i32 : i32
    %1 = arith.extui %0 : i1 to i32
    %c0_i32_0 = arith.constant 0 : i32
    %2 = arith.cmpi ne, %1, %c0_i32_0 : i32
    scf.if %2 {
      %c0_24 = arith.constant 0 : index
      %c0_25 = arith.constant 0 : index
      %72 = vector.load %arg5[%c0_24, %c0_25] : memref<8x32xf32, #tpu.memory_space<vmem>>, vector<8x32xf32>
      %c0_26 = arith.constant 0 : index
      %c0_27 = arith.constant 0 : index
      %73 = vector.load %arg8[%c0_26, %c0_27] : memref<8x32xf32, #tpu.memory_space<vmem>>, vector<8x32xf32>
      tpu.vector_store %arg8[%c0_26, %c0_27], %72 {strides = array<i32>} : memref<8x32xf32, #tpu.memory_space<vmem>>, vector<8x32xf32>,
    } else {
    }
    %3 = arith.index_cast %arg0 : i32 to index
    %c0 = arith.constant 0 : index
    %4 = memref.load %arg1[%3, %c0] : memref<8x8xi32, #tpu.memory_space<smem>>
    %5 = arith.index_cast %4 : i32 to index
    %c0_1 = arith.constant 0 : index
    %6 = vector.load %arg2[%5, %c0_1] : memref<16x32xf32, #tpu.memory_space<vmem>>, vector<1x32xf32>
    %7 = arith.index_cast %arg0 : i32 to index
    %c1 = arith.constant 1 : index
    %8 = memref.load %arg1[%7, %c1] : memref<8x8xi32, #tpu.memory_space<smem>>
    %9 = arith.index_cast %8 : i32 to index
    %c0_2 = arith.constant 0 : index
    %10 = vector.load %arg2[%9, %c0_2] : memref<16x32xf32, #tpu.memory_space<vmem>>, vector<1x32xf32>
    %11 = arith.index_cast %arg0 : i32 to index
    %c2 = arith.constant 2 : index
    %12 = memref.load %arg1[%11, %c2] : memref<8x8xi32, #tpu.memory_space<smem>>
    %13 = arith.index_cast %12 : i32 to index
    %c0_3 = arith.constant 0 : index
    %14 = vector.load %arg2[%13, %c0_3] : memref<16x32xf32, #tpu.memory_space<vmem>>, vector<1x32xf32>
    %15 = arith.index_cast %arg0 : i32 to index
    %c3 = arith.constant 3 : index
    %16 = memref.load %arg1[%15, %c3] : memref<8x8xi32, #tpu.memory_space<smem>>
    %17 = arith.index_cast %16 : i32 to index
    %c0_4 = arith.constant 0 : index
    %18 = vector.load %arg2[%17, %c0_4] : memref<16x32xf32, #tpu.memory_space<vmem>>, vector<1x32xf32>
    %19 = arith.index_cast %arg0 : i32 to index
    %c4 = arith.constant 4 : index
    %20 = memref.load %arg1[%19, %c4] : memref<8x8xi32, #tpu.memory_space<smem>>
    %21 = arith.index_cast %20 : i32 to index
    %c0_5 = arith.constant 0 : index
    %22 = vector.load %arg2[%21, %c0_5] : memref<16x32xf32, #tpu.memory_space<vmem>>, vector<1x32xf32>
    %23 = arith.index_cast %arg0 : i32 to index
    %c5 = arith.constant 5 : index
    %24 = memref.load %arg1[%23, %c5] : memref<8x8xi32, #tpu.memory_space<smem>>
    %25 = arith.index_cast %24 : i32 to index
    %c0_6 = arith.constant 0 : index
    %26 = vector.load %arg2[%25, %c0_6] : memref<16x32xf32, #tpu.memory_space<vmem>>, vector<1x32xf32>
    %27 = arith.index_cast %arg0 : i32 to index
    %c6 = arith.constant 6 : index
    %28 = memref.load %arg1[%27, %c6] : memref<8x8xi32, #tpu.memory_space<smem>>
    %29 = arith.index_cast %28 : i32 to index
    %c0_7 = arith.constant 0 : index
    %30 = vector.load %arg2[%29, %c0_7] : memref<16x32xf32, #tpu.memory_space<vmem>>, vector<1x32xf32>
    %31 = arith.index_cast %arg0 : i32 to index
    %c7 = arith.constant 7 : index
    %32 = memref.load %arg1[%31, %c7] : memref<8x8xi32, #tpu.memory_space<smem>>
    %33 = arith.index_cast %32 : i32 to index
    %c0_8 = arith.constant 0 : index
    %34 = vector.load %arg2[%33, %c0_8] : memref<16x32xf32, #tpu.memory_space<vmem>>, vector<1x32xf32>
    %35 = tpu.concatenate %6, %10, %14, %18, %22, %26, %30, %34 in 0 : vector<1x32xf32>, vector<1x32xf32>, vector<1x32xf32>, vector<1x32xf32>, vector<1x32xf32>, vector<1x32xf32>, vector<1x32xf32>, vector<1x32xf32> -> vector<8x32xf32>
    %c0_9 = arith.constant 0 : index
    %c0_10 = arith.constant 0 : index
    %36 = vector.load %arg8[%c0_9, %c0_10] : memref<8x32xf32, #tpu.memory_space<vmem>>, vector<8x32xf32>
    %c0_11 = arith.constant 0 : index
    %c0_12 = arith.constant 0 : index
    %37 = vector.load %arg3[%c0_11, %c0_12] : memref<64x128xf32, #tpu.memory_space<vmem>>, vector<64x128xf32>
    %c0_13 = arith.constant 0 : index
    %c0_14 = arith.constant 0 : index
    %38 = vector.load %arg4[%c0_13, %c0_14] : memref<1x128xf32, #tpu.memory_space<vmem>>, vector<1x128xf32>
    %39 = tpu.concatenate %35, %36 in 1 : vector<8x32xf32>, vector<8x32xf32> -> vector<8x64xf32>
    %cst = arith.constant dense<0.000000e+00> : vector<8x128xf32>
    %40 = tpu.matmul %39, %37, %cst {dimension_numbers = #tpu.dot_dimension_numbers<[1], [0], [0], [1], [0, 0, 1, 1], [], []>} : vector<8x64xf32>, vector<64x128xf32>, vector<8x128xf32> -> vector<8x128xf32>
    %41 = vector.broadcast %38 : vector<1x128xf32> to vector<8x128xf32>
    %42 = arith.addf %40, %41 : vector<8x128xf32>
    %43 = vector.extract_strided_slice %42 {offsets = [0, 0], sizes = [8, 32], strides = [1, 1]} : vector<8x128xf32> to vector<8x32xf32>
    %44 = arith.negf %43 : vector<8x32xf32>
    %45 = math.exp %44 : vector<8x32xf32>
    %cst_15 = arith.constant 1.000000e+00 : f32
    %46 = vector.broadcast %cst_15 : f32 to vector<8x32xf32>
    %47 = arith.addf %46, %45 : vector<8x32xf32>
    %48 = arith.divf %46, %47 : vector<8x32xf32>
    %49 = vector.extract_strided_slice %42 {offsets = [0, 32], sizes = [8, 32], strides = [1, 1]} : vector<8x128xf32> to vector<8x32xf32>
    %50 = arith.negf %49 : vector<8x32xf32>
    %51 = math.exp %50 : vector<8x32xf32>
    %cst_16 = arith.constant 1.000000e+00 : f32
    %52 = vector.broadcast %cst_16 : f32 to vector<8x32xf32>
    %53 = arith.addf %52, %51 : vector<8x32xf32>
    %54 = arith.divf %52, %53 : vector<8x32xf32>
    %55 = vector.extract_strided_slice %42 {offsets = [0, 64], sizes = [8, 32], strides = [1, 1]} : vector<8x128xf32> to vector<8x32xf32>
    %56 = vector.extract_strided_slice %42 {offsets = [0, 96], sizes = [8, 32], strides = [1, 1]} : vector<8x128xf32> to vector<8x32xf32>
    %57 = arith.mulf %48, %56 : vector<8x32xf32>
    %58 = arith.addf %55, %57 : vector<8x32xf32>
    %59 = math.tanh %58 : vector<8x32xf32>
    %cst_17 = arith.constant 1.000000e+00 : f32
    %60 = vector.broadcast %cst_17 : f32 to vector<8x32xf32>
    %61 = arith.subf %60, %54 : vector<8x32xf32>
    %62 = arith.mulf %61, %59 : vector<8x32xf32>
    %63 = arith.mulf %54, %36 : vector<8x32xf32>
    %64 = arith.addf %62, %63 : vector<8x32xf32>
    %c0_18 = arith.constant 0 : index
    %c0_19 = arith.constant 0 : index
    %65 = vector.load %arg8[%c0_18, %c0_19] : memref<8x32xf32, #tpu.memory_space<vmem>>, vector<8x32xf32>
    tpu.vector_store %arg8[%c0_18, %c0_19], %64 {strides = array<i32>} : memref<8x32xf32, #tpu.memory_space<vmem>>, vector<8x32xf32>,
    %c0_20 = arith.constant 0 : index
    %c0_21 = arith.constant 0 : index
    %c0_22 = arith.constant 0 : index
    %66 = vector.load %arg6[%c0_20, %c0_21, %c0_22] : memref<1x8x32xf32, #tpu.memory_space<vmem>>, vector<1x8x32xf32>
    %67 = vector.shape_cast %66 : vector<1x8x32xf32> to vector<8x32xf32>
    %68 = vector.shape_cast %64 : vector<8x32xf32> to vector<1x8x32xf32>
    tpu.vector_store %arg6[%c0_20, %c0_21, %c0_22], %68 {strides = array<i32>} : memref<1x8x32xf32, #tpu.memory_space<vmem>>, vector<1x8x32xf32>,
    %c7_i32 = arith.constant 7 : i32
    %69 = arith.cmpi eq, %arg0, %c7_i32 : i32
    %70 = arith.extui %69 : i1 to i32
    %c0_i32_23 = arith.constant 0 : i32
    %71 = arith.cmpi ne, %70, %c0_i32_23 : i32
    scf.if %71 {
      %c0_24 = arith.constant 0 : index
      %c0_25 = arith.constant 0 : index
      %72 = vector.load %arg7[%c0_24, %c0_25] : memref<8x32xf32, #tpu.memory_space<vmem>>, vector<8x32xf32>
      tpu.vector_store %arg7[%c0_24, %c0_25], %64 {strides = array<i32>} : memref<8x32xf32, #tpu.memory_space<vmem>>, vector<8x32xf32>,
    } else {
    }
    return
  }
  func.func @transform_0(%arg0: i32, %arg1: memref<8x8xi32, #tpu.memory_space<smem>>) -> (i32, i32) {
    %c0_i32 = arith.constant 0 : i32
    %c0_i32_0 = arith.constant 0 : i32
    %c0_i32_1 = arith.constant 0 : i32
    return %c0_i32, %c0_i32_0 : i32, i32
  }
  func.func @transform_1(%arg0: i32, %arg1: memref<8x8xi32, #tpu.memory_space<smem>>) -> (i32, i32) {
    %c0_i32 = arith.constant 0 : i32
    %c0_i32_0 = arith.constant 0 : i32
    %c0_i32_1 = arith.constant 0 : i32
    return %c0_i32, %c0_i32_0 : i32, i32
  }
  func.func @transform_2(%arg0: i32, %arg1: memref<8x8xi32, #tpu.memory_space<smem>>) -> (i32, i32) {
    %c0_i32 = arith.constant 0 : i32
    %c0_i32_0 = arith.constant 0 : i32
    %c0_i32_1 = arith.constant 0 : i32
    return %c0_i32, %c0_i32_0 : i32, i32
  }
  func.func @transform_3(%arg0: i32, %arg1: memref<8x8xi32, #tpu.memory_space<smem>>) -> (i32, i32) {
    %c0_i32 = arith.constant 0 : i32
    %c0_i32_0 = arith.constant 0 : i32
    %c0_i32_1 = arith.constant 0 : i32
    return %c0_i32, %c0_i32_0 : i32, i32
  }
  func.func @transform_4(%arg0: i32, %arg1: memref<8x8xi32, #tpu.memory_space<smem>>) -> (i32, i32, i32) {
    %c0_i32 = arith.constant 0 : i32
    %c0_i32_0 = arith.constant 0 : i32
    %c0_i32_1 = arith.constant 0 : i32
    return %arg0, %c0_i32, %c0_i32_0 : i32, i32, i32
  }
  func.func @transform_5(%arg0: i32, %arg1: memref<8x8xi32, #tpu.memory_space<smem>>) -> (i32, i32) {
    %c0_i32 = arith.constant 0 : i32
    %c0_i32_0 = arith.constant 0 : i32
    %c0_i32_1 = arith.constant 0 : i32
    return %c0_i32, %c0_i32_0 : i32, i32
  }
}

</mosaic_0001>

<llo_original>
// kernel: encoder_rnn_forward_seq.1
$region0: #{encoder_rnn_forward_seq.1}
  #allocation0 [shape = 'u32[]', space=smem, size = 0x4, offset = 0x4, fixed_abs, tag = 'smem constant byte address 0x4 - core index']
  #allocation1 [shape = 'u32[144,128]{1,0:T(1,128)}', space=vmem, size = 0x12000, scoped, tag = 'internal scratch']
  #allocation2 [shape = 'f32[8,32]{1,0:T(8,128)}', space=vmem, size = 0x1000, scoped, tag = 'scratch operand']
  #allocation3 [shape = 's32[1]{0}', space=sflag, size = 0x4, scoped, tag = 'scoped memory for encoder_rnn_forward_seq.1']
  #allocation4 [shape = 'u8[4096]{0}', space=smem, size = 0x1000, scoped, tag = 'prefetched SMEM operand 0']
  %s0 = inlined_call_operand.vmem [shape: s32[8,8], index: 0, kind: input, shape index: {}]
  %s1 = inlined_call_operand.vmem [shape: f32[16,32], index: 1, kind: input, shape index: {}]
  %s2 = inlined_call_operand.hbm [shape: f32[64,128], index: 2, kind: input, shape index: {}]
  %s3 = inlined_call_operand.vmem [shape: f32[1,128], index: 3, kind: input, shape index: {}]
  %s4 = inlined_call_operand.vmem [shape: f32[8,32], index: 4, kind: input, shape index: {}]
  %s5 = inlined_call_operand.hbm [shape: f32[8,8,32], index: 5, kind: output, shape index: {0}]
  %s6 = inlined_call_operand.hbm [shape: f32[8,32], index: 6, kind: output, shape index: {1}]
  %7 = xla_tuple %s5, %s6
  %s8 = sld [smem:[#allocation0]]
  $region69: #{encoder_rnn_forward_seq.1} parent=0
    _
  %s10 = ssub.s32 1, %s8
  %s11 = scalar_select 0, %s10, %s8
  %s12 = sshll.u32 %s0, 4
  %s13 = int_to_ptr.vmem [resolvable:$true] %s12
  %15 = dma.vmem_to_smem %s13, 128, [#allocation4], [#allocation3]
  %16 = dma.done [#allocation3], 128
  %17 = sfence
  $region1: #{encoder_rnn_forward_seq.1} parent=0
    #allocation5 [shape = 'u8[32768]{0}', space=vmem, size = 0x8000, scoped, tag = 'input window, operand 2, single buffered']
    #allocation6 [shape = 's32[2]{0}', space=sflag, size = 0x8, scoped, tag = 'scoped memory for encoder_rnn_forward_seq.1']
    #allocation7 [shape = 's32[2]{0}', space=sflag, size = 0x8, scoped, tag = 'scoped memory for encoder_rnn_forward_seq.1']
    #allocation8 [shape = 'u8[8192]{0}', space=vmem, size = 0x2000, scoped, tag = 'output window, operand 0']
    #allocation9 [shape = 'u8[4096]{0}', space=vmem, size = 0x1000, scoped, tag = 'output window, operand 1, single buffered']
    #allocation10 [shape = 's32[1]{0}', space=sflag, size = 0x4, scoped, tag = 'scoped memory for encoder_rnn_forward_seq.1']
    %18 = vsyncpa [#allocation6], 0
    %19 = vsyncpa [#allocation7], 0
    %s20 = scalar_lea.sflag [#allocation7], 1
    %21 = vsyncpa %s20, 0
    %22 = vsyncpa [#allocation10], 0
    loop: start=0, step=1, limit=10
    $region2: #{encoder_rnn_forward_seq.1} parent=1 // loop_pre_header
      _
    $region3: #{encoder_rnn_forward_seq.1} parent=1 // loop_header
      %s24 = sphi 0, %s28
      %p25 = scmp.ge.s32.totalorder %s24, 10
      %s32 = sphi 0, %s32
      %s34 = sphi 0, %s32
      %s35 = sphi 0, %s34
      %s49 = sphi 0, %s35
      %s53 = sphi 0, %s53
      %s55 = sphi 0, %s53
      %s56 = sphi 0, %s55
      %s70 = sphi 0, %s56
      %s74 = sphi 0, %s74
      %s76 = sphi 0, %s74
      %s77 = sphi 0, %s76
      %s91 = sphi 0, %s77
      %s95 = sphi 0, %s95
      %s97 = sphi 0, %s95
      %s98 = sphi 0, %s97
      %s112 = sphi 0, %s98
      %s118 = sphi 0, %s120
      %s121 = sphi 0, %s118
      %s122 = sphi 0, %s121
      %s138 = sphi 0, %s122
      %s142 = sphi 0, %s142
      %s144 = sphi 0, %s142
      %s145 = sphi 0, %s144
      %s159 = sphi 0, %s145
    $region4: #{encoder_rnn_forward_seq.1} parent=1 // loop_header_branch
      %27 = sbr.rel (%p25) target = $region8
    $region5: #{encoder_rnn_forward_seq.1} parent=1 // loop_body
      %s29 = ssub.s32 %s24, 1
      %s30 = ssub.s32 %s24, 2
      %s31 = sadd.s32 %s24, 1
      %s33 = sadd.s32 %s32, 1
      %p36 = scmp.eq.s32.totalorder %s24, 7
      %p37 = scmp.ne.s32.totalorder %s32, %s34
      %p38 = scmp.eq.s32.totalorder %s24, 0
      %p39 = por %p37, %p38
      %p40 = scmp.ne.s32.totalorder %s32, %s34
      %p41 = scmp.eq.s32.totalorder %s29, 7
      %p42 = por %p40, %p41
      %p43 = scmp.ne.s32.totalorder %s34, %s35
      %p44 = scmp.eq.s32.totalorder %s29, 0
      %p45 = por %p43, %p44
      %p46 = scmp.ne.s32.totalorder %s34, %s35
      %p47 = scmp.eq.s32.totalorder %s30, 7
      %p48 = por %p46, %p47
      %p50 = scmp.ne.s32.totalorder %s35, %s49
      %p51 = scmp.eq.s32.totalorder %s30, 0
      %p52 = por %p50, %p51
      %s54 = sadd.s32 %s53, 1
      %p57 = scmp.eq.s32.totalorder %s24, 7
      %p58 = scmp.ne.s32.totalorder %s53, %s55
      %p59 = scmp.eq.s32.totalorder %s24, 0
      %p60 = por %p58, %p59
      %p61 = scmp.ne.s32.totalorder %s53, %s55
      %p62 = scmp.eq.s32.totalorder %s29, 7
      %p63 = por %p61, %p62
      %p64 = scmp.ne.s32.totalorder %s55, %s56
      %p65 = scmp.eq.s32.totalorder %s29, 0
      %p66 = por %p64, %p65
      %p67 = scmp.ne.s32.totalorder %s55, %s56
      %p68 = scmp.eq.s32.totalorder %s30, 7
      %p69 = por %p67, %p68
      %p71 = scmp.ne.s32.totalorder %s56, %s70
      %p72 = scmp.eq.s32.totalorder %s30, 0
      %p73 = por %p71, %p72
      %s75 = sadd.s32 %s74, 1
      %p78 = scmp.eq.s32.totalorder %s24, 7
      %p79 = scmp.ne.s32.totalorder %s74, %s76
      %p80 = scmp.eq.s32.totalorder %s24, 0
      %p81 = por %p79, %p80
      %p82 = scmp.ne.s32.totalorder %s74, %s76
      %p83 = scmp.eq.s32.totalorder %s29, 7
      %p84 = por %p82, %p83
      %p85 = scmp.ne.s32.totalorder %s76, %s77
      %p86 = scmp.eq.s32.totalorder %s29, 0
      %p87 = por %p85, %p86
      %p88 = scmp.ne.s32.totalorder %s76, %s77
      %p89 = scmp.eq.s32.totalorder %s30, 7
      %p90 = por %p88, %p89
      %p92 = scmp.ne.s32.totalorder %s77, %s91
      %p93 = scmp.eq.s32.totalorder %s30, 0
      %p94 = por %p92, %p93
      %s96 = sadd.s32 %s95, 1
      %p99 = scmp.eq.s32.totalorder %s24, 7
      %p100 = scmp.ne.s32.totalorder %s95, %s97
      %p101 = scmp.eq.s32.totalorder %s24, 0
      %p102 = por %p100, %p101
      %p103 = scmp.ne.s32.totalorder %s95, %s97
      %p104 = scmp.eq.s32.totalorder %s29, 7
      %p105 = por %p103, %p104
      %p106 = scmp.ne.s32.totalorder %s97, %s98
      %p107 = scmp.eq.s32.totalorder %s29, 0
      %p108 = por %p106, %p107
      %p109 = scmp.ne.s32.totalorder %s97, %s98
      %p110 = scmp.eq.s32.totalorder %s30, 7
      %p111 = por %p109, %p110
      %p113 = scmp.ne.s32.totalorder %s98, %s112
      %p114 = scmp.eq.s32.totalorder %s30, 0
      %p115 = por %p113, %p114
      %s116 = ssub.s32 %s24, %s31
      %p117 = scmp.eq.s32.totalorder %s116, 0
      %s119 = sadd.s32 %s118, 1
      %s120 = scalar_select %p117, %s118, %s119
      %p123 = pneg %p117
      %p124 = scmp.eq.s32.totalorder %s24, 7
      %p125 = por %p123, %p124
      %p126 = scmp.ne.s32.totalorder %s118, %s121
      %p127 = scmp.eq.s32.totalorder %s24, 0
      %p128 = por %p126, %p127
      %p129 = scmp.ne.s32.totalorder %s118, %s121
      %p130 = scmp.eq.s32.totalorder %s29, 7
      %p131 = por %p129, %p130
      %p132 = scmp.ne.s32.totalorder %s121, %s122
      %p133 = scmp.eq.s32.totalorder %s29, 0
      %p134 = por %p132, %p133
      %p135 = scmp.ne.s32.totalorder %s121, %s122
      %p136 = scmp.eq.s32.totalorder %s30, 7
      %p137 = por %p135, %p136
      %p139 = scmp.ne.s32.totalorder %s122, %s138
      %p140 = scmp.eq.s32.totalorder %s30, 0
      %p141 = por %p139, %p140
      %s143 = sadd.s32 %s142, 1
      %p146 = scmp.eq.s32.totalorder %s24, 7
      %p147 = scmp.ne.s32.totalorder %s142, %s144
      %p148 = scmp.eq.s32.totalorder %s24, 0
      %p149 = por %p147, %p148
      %p150 = scmp.ne.s32.totalorder %s142, %s144
      %p151 = scmp.eq.s32.totalorder %s29, 7
      %p152 = por %p150, %p151
      %p153 = scmp.ne.s32.totalorder %s144, %s145
      %p154 = scmp.eq.s32.totalorder %s29, 0
      %p155 = por %p153, %p154
      %p156 = scmp.ne.s32.totalorder %s144, %s145
      %p157 = scmp.eq.s32.totalorder %s30, 7
      %p158 = por %p156, %p157
      %p160 = scmp.ne.s32.totalorder %s145, %s159
      %p161 = scmp.eq.s32.totalorder %s30, 0
      %p162 = por %p160, %p161
      %p163 = scmp.le.s32.totalorder 1, %s24
      %p164 = scmp.lt.s32.totalorder %s24, 9
      %p165 = pnand %p163, %p164
      %p166 = pneg %p165
      // Predicated region
      $region9: #{encoder_rnn_forward_seq.1} parent=5 // pred_check
        _
      $region10: #{encoder_rnn_forward_seq.1} parent=5 // pred_check_branch
        %168 = sbr.rel (%p165) target = $region12
      $region11: #{encoder_rnn_forward_seq.1} parent=5 // pred_region
        %s169 = ssub.s32 %s24, 1
        // Predicated region
        $region13: #{encoder_rnn_forward_seq.1} parent=11 // pred_check
          %p170 = pneg %p45
        $region14: #{encoder_rnn_forward_seq.1} parent=11 // pred_check_branch
          %172 = sbr.rel (%p170) target = $region16
        $region15: #{encoder_rnn_forward_seq.1} parent=11 // pred_region
          _
        $region16: #{encoder_rnn_forward_seq.1} parent=11 // pred_fallthru
          _
        // Predicated region
        $region17: #{encoder_rnn_forward_seq.1} parent=11 // pred_check
          %p173 = pneg %p66
        $region18: #{encoder_rnn_forward_seq.1} parent=11 // pred_check_branch
          %175 = sbr.rel (%p173) target = $region20
        $region19: #{encoder_rnn_forward_seq.1} parent=11 // pred_region
          %s177 = ssub.s32 1024, 1024
          %178 = vsyncadd [#allocation6], %s177
          %s179 = sshll.u32 [#allocation5], 4
          %s180 = int_to_ptr.vmem [resolvable:$true] %s179
          %185 = dma.hbm_to_vmem [thread:$0]  %s2, 1024, %s180, [#allocation6], 128, 128, 8
        $region20: #{encoder_rnn_forward_seq.1} parent=11 // pred_fallthru
          _
        // Predicated region
        $region21: #{encoder_rnn_forward_seq.1} parent=11 // pred_check
          %p186 = pneg %p87
        $region22: #{encoder_rnn_forward_seq.1} parent=11 // pred_check_branch
          %188 = sbr.rel (%p186) target = $region24
        $region23: #{encoder_rnn_forward_seq.1} parent=11 // pred_region
          _
        $region24: #{encoder_rnn_forward_seq.1} parent=11 // pred_fallthru
          _
        // Predicated region
        $region25: #{encoder_rnn_forward_seq.1} parent=11 // pred_check
          %p189 = pneg %p108
        $region26: #{encoder_rnn_forward_seq.1} parent=11 // pred_check_branch
          %191 = sbr.rel (%p189) target = $region28
        $region27: #{encoder_rnn_forward_seq.1} parent=11 // pred_region
          _
        $region28: #{encoder_rnn_forward_seq.1} parent=11 // pred_fallthru
          _
      $region12: #{encoder_rnn_forward_seq.1} parent=5 // pred_fallthru
        _
      %p192 = scmp.lt.s32.totalorder %s24, 8
      // Predicated region
      $region29: #{encoder_rnn_forward_seq.1} parent=5 // pred_check
        %p193 = pneg %p192
      $region30: #{encoder_rnn_forward_seq.1} parent=5 // pred_check_branch
        %195 = sbr.rel (%p193) target = $region32
      $region31: #{encoder_rnn_forward_seq.1} parent=5 // pred_region
        _
      $region32: #{encoder_rnn_forward_seq.1} parent=5 // pred_fallthru
        _
      %p196 = scmp.le.s32.totalorder 1, %s24
      %p197 = scmp.lt.s32.totalorder %s24, 9
      %p198 = pnand %p196, %p197
      %p199 = pneg %p198
      // Predicated region
      $region33: #{encoder_rnn_forward_seq.1} parent=5 // pred_check
        _
      $region34: #{encoder_rnn_forward_seq.1} parent=5 // pred_check_branch
        %201 = sbr.rel (%p198) target = $region36
      $region35: #{encoder_rnn_forward_seq.1} parent=5 // pred_region
        %s202 = ssub.s32 %s24, 1
        // Predicated region
        $region37: #{encoder_rnn_forward_seq.1} parent=35 // pred_check
          %p203 = pneg %p66
        $region38: #{encoder_rnn_forward_seq.1} parent=35 // pred_check_branch
          %205 = sbr.rel (%p203) target = $region40
        $region39: #{encoder_rnn_forward_seq.1} parent=35 // pred_region
          %206 = dma.done [#allocation6], 1024
        $region40: #{encoder_rnn_forward_seq.1} parent=35 // pred_fallthru
          _
        %p207 = pneg %p45
        %p208 = pneg %p42
        %p209 = pneg %p66
        %p210 = pneg %p63
        %p211 = pneg %p87
        %p212 = pneg %p84
        %p213 = pneg %p108
        %p214 = pneg %p105
        %p215 = pneg %p134
        %p216 = pneg %p131
        %s217 = sand.u32 %s121, 1
        %s218 = scalar_lea.sflag [#allocation7], %s217
        %s219 = sand.u32 %s121, 1
        %s220 = smul.addr %s219, 8
        %s221 = scalar_lea.vmem [#allocation8], %s220
        %p222 = pneg %p155
        %p223 = pneg %p152
        %p224 = scmp.eq.s32.totalorder %s29, 0
        // Predicated region
        $region41: #{encoder_rnn_forward_seq.1} parent=35 // pred_check
          %p225 = pneg %p224
        $region42: #{encoder_rnn_forward_seq.1} parent=35 // pred_check_branch
          %227 = sbr.rel (%p225) target = $region44
        $region43: #{encoder_rnn_forward_seq.1} parent=35 // pred_region
          %v228 = vld [vmem:[%s4] sm:$0xff]
          %vm229 = vcmask 261120
          %230 = vst.msk [vmem:[#allocation2] sm:$0xff] %vm229, %v228
        $region44: #{encoder_rnn_forward_seq.1} parent=35 // pred_fallthru
          _
        %s231 = smul.u32 %s29, 128
        %s232 = sld [smem:[#allocation4 + %s231]]
        %s233 = scalar_lea.vmem %s1, %s232
        %v234 = vld [vmem:[%s233] sm:$0x1]
        %s235 = sadd.s32 %s231, 1
        %s236 = sld [smem:[#allocation4 + %s235]]
        %s237 = scalar_lea.vmem %s1, %s236
        %v238 = vld [vmem:[%s237] sm:$0x1]
        %s239 = sadd.s32 %s231, 2
        %s240 = sld [smem:[#allocation4 + %s239]]
        %s241 = scalar_lea.vmem %s1, %s240
        %v242 = vld [vmem:[%s241] sm:$0x1]
        %s243 = sadd.s32 %s231, 3
        %s244 = sld [smem:[#allocation4 + %s243]]
        %s245 = scalar_lea.vmem %s1, %s244
        %v246 = vld [vmem:[%s245] sm:$0x1]
        %s247 = sadd.s32 %s231, 4
        %s248 = sld [smem:[#allocation4 + %s247]]
        %s249 = scalar_lea.vmem %s1, %s248
        %v250 = vld [vmem:[%s249] sm:$0x1]
        %s251 = sadd.s32 %s231, 5
        %s252 = sld [smem:[#allocation4 + %s251]]
        %s253 = scalar_lea.vmem %s1, %s252
        %v254 = vld [vmem:[%s253] sm:$0x1]
        %s255 = sadd.s32 %s231, 6
        %s256 = sld [smem:[#allocation4 + %s255]]
        %s257 = scalar_lea.vmem %s1, %s256
        %v258 = vld [vmem:[%s257] sm:$0x1]
        %s259 = sadd.s32 %s231, 7
        %s260 = sld [smem:[#allocation4 + %s259]]
        %s261 = scalar_lea.vmem %s1, %s260
        %v262 = vld [vmem:[%s261] sm:$0x1]
        %v264 = vrot.slane %v238, 7
        %v267 = vrot.slane %v242, 6
        %v270 = vrot.slane %v246, 5
        %v273 = vrot.slane %v250, 4
        %v276 = vrot.slane %v254, 3
        %v279 = vrot.slane %v258, 2
        %v282 = vrot.slane %v262, 1
        %vm284 = vcmask 1040384
        %v285 = vsel %vm284, %v234, %v264
        %vm286 = vcmask 1041408
        %v287 = vsel %vm286, %v285, %v267
        %vm288 = vcmask 1042432
        %v289 = vsel %vm288, %v287, %v270
        %vm290 = vcmask 1043456
        %v291 = vsel %vm290, %v289, %v273
        %vm292 = vcmask 1044480
        %v293 = vsel %vm292, %v291, %v276
        %vm294 = vcmask 1045504
        %v295 = vsel %vm294, %v293, %v279
        %vm296 = vcmask 1046528
        %v297 = vsel %vm296, %v295, %v282
        %v298 = vld [vmem:[#allocation2] sm:$0xff]
        %v299 = vld [vmem:[#allocation5] sm:$0xff]
        %v300 = vld [vmem:[#allocation5 + $0x8] sm:$0xff]
        %v301 = vld [vmem:[#allocation5 + $0x10] sm:$0xff]
        %v302 = vld [vmem:[#allocation5 + $0x18] sm:$0xff]
        %v303 = vld [vmem:[#allocation5 + $0x20] sm:$0xff]
        %v304 = vld [vmem:[#allocation5 + $0x28] sm:$0xff]
        %v305 = vld [vmem:[#allocation5 + $0x30] sm:$0xff]
        %v306 = vld [vmem:[#allocation5 + $0x38] sm:$0xff]
        %v307 = vld [vmem:[%s3] sm:$0x1]
        %309 = vrot.lane.b32.xlu0 %v298, 32
        %v310 = vpop.permute.xlu0 %309
        %vm312 = vcmask 261120
        %v313 = vsel %vm312, %v297, %v310
        %v315 = vlaneseq
        %v316 = vshrl.u32 %v315, 7
        %v317 = vsub.s32 0, %v316
        %v318 = vrot.slane %v307, %v317
        %vm320 = vcmask 523264
        %v322 = vsel %vm320, %v313, 0
        %324 = vmatprep.subr.mxu0 0.0
        %325 = vmatpush1.msra.mxu0 %v299
        %326 = vmatprep.subr.mxu0 0.0
        %327 = vmatpush1.msra.mxu0 %v300
        %328 = vmatprep.subr.mxu0 0.0
        %329 = vmatpush1.msra.mxu0 %v301
        %330 = vmatprep.subr.mxu0 0.0
        %331 = vmatpush1.msra.mxu0 %v302
        %332 = vmatprep.subr.mxu0 0.0
        %333 = vmatpush1.msra.mxu0 %v303
        %334 = vmatprep.subr.mxu0 0.0
        %335 = vmatpush1.msra.mxu0 %v304
        %336 = vmatprep.subr.mxu0 0.0
        %337 = vmatpush1.msra.mxu0 %v305
        %338 = vmatprep.subr.mxu0 0.0
        %339 = vmatpush1.msra.mxu0 %v306
        %340 = vmatprep.subr.mxu0 0.0
        %341 = vmatpush1.msra.mxu0 0.0
        %342 = vmatprep.subr.mxu0 0.0
        %343 = vmatpush1.msra.mxu0 0.0
        %344 = vmatprep.subr.mxu0 0.0
        %345 = vmatpush1.msra.mxu0 0.0
        %346 = vmatprep.subr.mxu0 0.0
        %347 = vmatpush1.msra.mxu0 0.0
        %348 = vmatprep.subr.mxu0 0.0
        %349 = vmatpush1.msra.mxu0 0.0
        %350 = vmatprep.subr.mxu0 0.0
        %351 = vmatpush1.msra.mxu0 0.0
        %352 = vmatprep.subr.mxu0 0.0
        %353 = vmatpush1.msra.mxu0 0.0
        %354 = vmatprep.subr.mxu0 0.0
        %355 = vmatpush1.msra.mxu0 0.0
        %356 = vmatprep.subr.mxu0 0.0
        %357 = vmatpush1.msra.mxu0 0.0
        %358 = vmatprep.subr.mxu0 0.0
        %359 = vmatpush1.msra.mxu0 0.0
        %360 = vmatprep.subr.mxu0 0.0
        %361 = vmatpush1.msra.mxu0 0.0
        %362 = vmatprep.subr.mxu0 0.0
        %363 = vmatpush1.msra.mxu0 0.0
        %364 = vmatprep.subr.mxu0 0.0
        %365 = vmatpush1.msra.mxu0 0.0
        %366 = vmatprep.subr.mxu0 0.0
        %367 = vmatpush1.msra.mxu0 0.0
        %368 = vmatprep.subr.mxu0 0.0
        %369 = vmatpush1.msra.mxu0 0.0
        %370 = vmatprep.subr.mxu0 0.0
        %371 = vmatpush1.msra.mxu0 0.0
        %372 = vmatprep.subr.mxu0 0.0
        %373 = vmatpush1.msra.mxu0 0.0
        %374 = vmatprep.subr.mxu0 0.0
        %375 = vmatpush1.msra.mxu0 0.0
        %376 = vmatprep.subr.mxu0 0.0
        %377 = vmatpush1.msra.mxu0 0.0
        %378 = vmatprep.subr.mxu0 0.0
        %379 = vmatpush1.msra.mxu0 0.0
        %380 = vmatprep.subr.mxu0 0.0
        %381 = vmatpush1.msra.mxu0 0.0
        %382 = vmatprep.subr.mxu0 0.0
        %383 = vmatpush1.msra.mxu0 0.0
        %384 = vmatprep.subr.mxu0 0.0
        %385 = vmatpush1.msra.mxu0 0.0
        %386 = vmatprep.subr.mxu0 0.0
        %387 = vmatpush1.msra.mxu0 0.0
        %388 = vmatprep.mubr.f32.mxu0 0.0
        %389 = vmatmul.mubr.f32.gmra.mrb[0].mxu0 %v322
        %v390 = vpop.f32.mrb[0].mxu0
        %v391 = vadd.f32 %v318, %v390
        %v392 = vpop.f32.mrb[0].mxu0
        %393 = vdwg.mxu0
        %v394 = vxor.u32 %v391, 2147483648
        %v395 = vmul.f32 %v394, 1.442695
        %v396 = vpow.pop %v395
        %v397 = vadd.f32 %v396, 1.0
        %v398 = vrcp.pop %v397
        %v399 = vmul.f32 1.0, %v398
        %401 = vrot.lane.b32.xlu0 %v391, 32
        %v402 = vpop.permute.xlu0 %401
        %v404 = vmul.f32 %v399, %v402
        %406 = vrot.lane.b32.xlu0 %v404, 64
        %v407 = vpop.permute.xlu0 %406
        %v409 = vadd.f32 %v391, %v407
        %v410 = vtanh.pop %v409
        %v411 = vsub.f32 1.0, %v399
        %413 = vrot.lane.b32.xlu0 %v410, 96
        %v414 = vpop.permute.xlu0 %413
        %v416 = vmul.f32 %v411, %v414
        %v417 = vmul.f32 %v399, %v310
        %v418 = vadd.f32 %v416, %v417
        %420 = vrot.lane.b32.xlu0 %v418, 96
        %v421 = vpop.permute.xlu0 %420
        %423 = vst.msk [vmem:[#allocation2] sm:$0xff] %vm312, %v421
        %424 = vst.msk [vmem:[%s221] sm:$0xff] %vm312, %v421
        %p425 = scmp.eq.s32.totalorder %s29, 7
        // Predicated region
        $region45: #{encoder_rnn_forward_seq.1} parent=35 // pred_check
          %p426 = pneg %p425
        $region46: #{encoder_rnn_forward_seq.1} parent=35 // pred_check_branch
          %428 = sbr.rel (%p426) target = $region48
        $region47: #{encoder_rnn_forward_seq.1} parent=35 // pred_region
          %429 = vst.msk [vmem:[#allocation9] sm:$0xff] %vm312, %v421
        $region48: #{encoder_rnn_forward_seq.1} parent=35 // pred_fallthru
          _
        %s430 = sand.u32 %s121, 1
        %s431 = scalar_lea.sflag [#allocation7], %s430
        %s432 = sand.u32 %s121, 1
        %s433 = smul.addr %s432, 8
        %s434 = scalar_lea.vmem [#allocation8], %s433
        // Predicated region
        $region49: #{encoder_rnn_forward_seq.1} parent=35 // pred_check
          %p435 = pneg %p131
        $region50: #{encoder_rnn_forward_seq.1} parent=35 // pred_check_branch
          %437 = sbr.rel (%p435) target = $region52
        $region51: #{encoder_rnn_forward_seq.1} parent=35 // pred_region
          %s439 = ssub.s32 128, 128
          %440 = vsyncadd %s431, %s439
          %s441 = smul.addr %s29, 128
          %s442 = scalar_lea.hbm %s5, %s441
          %s444 = sshll.u32 %s434, 4
          %s445 = int_to_ptr.vmem [resolvable:$true] %s444
          %447 = dma.vmem_to_hbm [thread:$0]  %s445, 128, %s442, %s431
        $region52: #{encoder_rnn_forward_seq.1} parent=35 // pred_fallthru
          _
        // Predicated region
        $region53: #{encoder_rnn_forward_seq.1} parent=35 // pred_check
          %p448 = pneg %p152
        $region54: #{encoder_rnn_forward_seq.1} parent=35 // pred_check_branch
          %450 = sbr.rel (%p448) target = $region56
        $region55: #{encoder_rnn_forward_seq.1} parent=35 // pred_region
          %s452 = ssub.s32 128, 128
          %453 = vsyncadd [#allocation10], %s452
          %s455 = sshll.u32 [#allocation9], 4
          %s456 = int_to_ptr.vmem [resolvable:$true] %s455
          %458 = dma.vmem_to_hbm [thread:$0]  %s456, 128, %s6, [#allocation10]
        $region56: #{encoder_rnn_forward_seq.1} parent=35 // pred_fallthru
          _
        // Predicated region
        $region57: #{encoder_rnn_forward_seq.1} parent=35 // pred_check
          %p459 = pneg %p152
        $region58: #{encoder_rnn_forward_seq.1} parent=35 // pred_check_branch
          %461 = sbr.rel (%p459) target = $region60
        $region59: #{encoder_rnn_forward_seq.1} parent=35 // pred_region
          %462 = dma.done [#allocation10], 128
        $region60: #{encoder_rnn_forward_seq.1} parent=35 // pred_fallthru
          _
      $region36: #{encoder_rnn_forward_seq.1} parent=5 // pred_fallthru
        _
      %p463 = scmp.le.s32.totalorder 2, %s24
      // Predicated region
      $region61: #{encoder_rnn_forward_seq.1} parent=5 // pred_check
        %p464 = pneg %p463
      $region62: #{encoder_rnn_forward_seq.1} parent=5 // pred_check_branch
        %466 = sbr.rel (%p464) target = $region64
      $region63: #{encoder_rnn_forward_seq.1} parent=5 // pred_region
        %s467 = ssub.s32 %s24, 2
        // Predicated region
        $region65: #{encoder_rnn_forward_seq.1} parent=63 // pred_check
          %p468 = pneg %p137
        $region66: #{encoder_rnn_forward_seq.1} parent=63 // pred_check_branch
          %470 = sbr.rel (%p468) target = $region68
        $region67: #{encoder_rnn_forward_seq.1} parent=63 // pred_region
          %s471 = sand.u32 %s122, 1
          %s472 = scalar_lea.sflag [#allocation7], %s471
          %s473 = sand.u32 %s122, 1
          %s474 = smul.addr %s473, 8
          %s475 = scalar_lea.vmem [#allocation8], %s474
          %476 = dma.done %s472, 128
        $region68: #{encoder_rnn_forward_seq.1} parent=63 // pred_fallthru
          _
      $region64: #{encoder_rnn_forward_seq.1} parent=5 // pred_fallthru
        _
    $region6: #{encoder_rnn_forward_seq.1} parent=1 // loop_footer
      %s28 = sadd.s32 1, %s24
    $region7: #{encoder_rnn_forward_seq.1} parent=1 // loop_footer_branch
      %23 = sbr.rel target = $region3
    $region8: #{encoder_rnn_forward_seq.1} parent=1 // loop_exit
      _
    %477 = vsyncpa [#allocation6], 1
    %s478 = scalar_lea.sflag [#allocation6], 1
    %479 = vsyncpa %s478, 1
    %480 = vsyncpa [#allocation7], 1
    %s481 = scalar_lea.sflag [#allocation7], 1
    %482 = vsyncpa %s481, 1
    %483 = vsyncpa [#allocation10], 1

</llo_original>
